<compile_context>
chip_gen: v7x
topology: tpu7x:2x2x1
jax: 0.10.0
libtpu: 0.0.40
codegen_flags: <defaults>
</compile_context>

<pallas_src>
import math
import numpy as np
import jax
import jax.numpy as jnp
from jax.experimental import pallas as pl
from jax.experimental.pallas import tpu as pltpu


# --------------------------------------------------------------------------- #
# Tiling helpers
# --------------------------------------------------------------------------- #
_MXU_CAP_CACHE = None


def _mxu_cap():
    """256-wide MXU tiles on v6e/newer, 128 on v5e and older."""
    global _MXU_CAP_CACHE
    if _MXU_CAP_CACHE is None:
        cap = 256
        try:
            kind = jax.devices()[0].device_kind.lower()
            if any(t in kind for t in ("v2", "v3", "v4", "v5")):
                cap = 128
        except Exception:
            cap = 128
        _MXU_CAP_CACHE = cap
    return _MXU_CAP_CACHE


def _pick_div(M, cap, candidates=(2048, 1024, 512, 256, 128, 64, 32, 16, 8)):
    """Largest candidate <= cap that divides M exactly; fall back to full extent."""
    for t in candidates:
        if t <= cap and t <= M and M % t == 0:
            return t
    return M


def _lane_fold(M, C):
    """Fold rows so the minor dim becomes 128 when C divides 128 (lane-dense stores)."""
    if C < 128 and 128 % C == 0 and M % (128 // C) == 0:
        return 128 // C
    return 1


# --------------------------------------------------------------------------- #
# Pallas kernels
# --------------------------------------------------------------------------- #
def _matmul_stats_kernel(a_ref, b_ref, o_ref, s_ref, q_ref):
    # grid = (N_tiles, M_tiles): N axis (outer) is parallel; M axis (inner) accumulates
    # the per-channel sum / sum-of-squares outputs (resident (1, tn) blocks).
    @pl.when(pl.program_id(1) == 0)
    def _():
        s_ref[...] = jnp.zeros_like(s_ref)
        q_ref[...] = jnp.zeros_like(q_ref)

    y = jnp.dot(a_ref[...], b_ref[...], preferred_element_type=jnp.float32)
    o_ref[...] = y
    s_ref[...] += jnp.sum(y, axis=0, keepdims=True)
    q_ref[...] += jnp.sum(y * y, axis=0, keepdims=True)


def _matmul_kernel(a_ref, b_ref, o_ref):
    o_ref[...] = jnp.dot(a_ref[...], b_ref[...], preferred_element_type=jnp.float32)


def _bn_relu_kernel(x_ref, s_ref, b_ref, o_ref):
    o_ref[...] = jnp.maximum(x_ref[...] * s_ref[...] + b_ref[...], 0.0)


def _bn_plain_kernel(x_ref, s_ref, b_ref, o_ref):
    o_ref[...] = x_ref[...] * s_ref[...] + b_ref[...]


def _bn_res_relu_kernel(x_ref, s_ref, b_ref, r_ref, o_ref):
    o_ref[...] = jnp.maximum(x_ref[...] * s_ref[...] + b_ref[...] + r_ref[...], 0.0)


def _max9_kernel(*refs):
    o_ref = refs[-1]
    m = refs[0][...]
    for r in refs[1:-1]:
        m = jnp.maximum(m, r[...])
    o_ref[...] = m


def _avgpool_kernel(x_ref, o_ref):
    m = jnp.mean(x_ref[0], axis=0, keepdims=True)      # (1, C)
    o_ref[...] = m.reshape(o_ref.shape)                # (1, 1, C)


# --------------------------------------------------------------------------- #
# Pallas wrappers
# --------------------------------------------------------------------------- #
def conv_matmul_stats(a, b):
    """(M,K) x (K,N) bf16 matmul with fused per-column sum / sum-of-squares.

    Full-K blocks (no reduction grid axis, no operand padding): tm/tn always divide M/N.
    """
    M, K = a.shape
    _, N = b.shape
    cap = _mxu_cap()
    tm = _pick_div(M, cap, (256, 128, 64, 32, 16))
    nm = M // tm
    if N <= 128:
        tn = N
    elif nm >= 2 and cap >= 256 and N % 256 == 0:
        tn = 256
    elif N % 128 == 0:
        tn = 128           # >= 2 N-blocks keeps the second TensorCore busy (v7x)
    else:
        tn = N
    nn_ = N // tn

    out, s, q = pl.pallas_call(
        _matmul_stats_kernel,
        out_shape=(jax.ShapeDtypeStruct((M, N), jnp.float32),
                   jax.ShapeDtypeStruct((1, N), jnp.float32),
                   jax.ShapeDtypeStruct((1, N), jnp.float32)),
        grid=(nn_, nm),
        in_specs=[pl.BlockSpec((tm, K), lambda j, i: (i, 0)),
                  pl.BlockSpec((K, tn), lambda j, i: (0, j))],
        out_specs=(pl.BlockSpec((tm, tn), lambda j, i: (i, j)),
                   pl.BlockSpec((1, tn), lambda j, i: (0, j)),
                   pl.BlockSpec((1, tn), lambda j, i: (0, j))),
        compiler_params=pltpu.CompilerParams(
            dimension_semantics=("parallel", "arbitrary")),
    )(a, b)
    return out, s, q


def pallas_matmul_small(a, b):
    """Single-block f32 matmul for the tiny dense layers (alpha / Bw / GRU proj / fc)."""
    a = a.astype(jnp.float32)
    b = b.astype(jnp.float32)
    M, K = a.shape
    _, N = b.shape
    Mp = max(8, ((M + 7) // 8) * 8)
    Kp = ((K + 127) // 128) * 128
    Np = ((N + 127) // 128) * 128
    if (Mp, Kp) != (M, K):
        a = jnp.pad(a, ((0, Mp - M), (0, Kp - K)))
    if (Kp, Np) != (K, N):
        b = jnp.pad(b, ((0, Kp - K), (0, Np - N)))
    out = pl.pallas_call(
        _matmul_kernel,
        out_shape=jax.ShapeDtypeStruct((Mp, Np), jnp.float32),
    )(a, b)
    return out[:M, :N]


def _bn_apply(x2d, scale, shift, relu, res2d):
    """Fused scale*x + shift (+ residual) (+ ReLU) on a channels-last 2D view."""
    M, C = x2d.shape
    fold = _lane_fold(M, C)
    Mf, Cf = M // fold, C * fold
    xf = x2d.reshape(Mf, Cf)
    sc = jnp.tile(scale, (1, fold))
    sh = jnp.tile(shift, (1, fold))
    tmr = _pick_div(Mf, 1024)

    args = [xf, sc, sh]
    in_specs = [pl.BlockSpec((tmr, Cf), lambda i: (i, 0)),
                pl.BlockSpec((1, Cf), lambda i: (0, 0)),
                pl.BlockSpec((1, Cf), lambda i: (0, 0))]
    if res2d is not None:
        assert relu, "residual path is always followed by ReLU in this network"
        args.append(res2d.reshape(Mf, Cf))
        in_specs.append(pl.BlockSpec((tmr, Cf), lambda i: (i, 0)))
        kernel = _bn_res_relu_kernel
    else:
        kernel = _bn_relu_kernel if relu else _bn_plain_kernel

    y = pl.pallas_call(
        kernel,
        out_shape=jax.ShapeDtypeStruct((Mf, Cf), jnp.float32),
        grid=(Mf // tmr,),
        in_specs=in_specs,
        out_specs=pl.BlockSpec((tmr, Cf), lambda i: (i, 0)),
        compiler_params=pltpu.CompilerParams(dimension_semantics=("parallel",)),
    )(*args)
    return y.reshape(M, C)


# --------------------------------------------------------------------------- #
# Layers (NHWC throughout; im2col glue in plain JAX)
# --------------------------------------------------------------------------- #
def conv_bn(x, w, gamma, beta, *, stride, padding, relu=True, residual=None, eps=1e-5):
    """conv2d (bias=False) + training-mode BatchNorm2d (+ReLU, +residual). NHWC in/out."""
    N, H, W, C = x.shape
    OC, IC, KH, KW = w.shape
    OH = (H + 2 * padding - KH) // stride + 1
    OW = (W + 2 * padding - KW) // stride + 1

    xb = x.astype(jnp.bfloat16)
    if padding:
        xb = jnp.pad(xb, ((0, 0), (padding, padding), (padding, padding), (0, 0)))
    cols = [xb[:, kh:kh + stride * OH:stride, kw:kw + stride * OW:stride, :]
            for kh in range(KH) for kw in range(KW)]
    if len(cols) == 1:
        col = cols[0].reshape(N * OH * OW, IC)
    else:
        col = jnp.stack(cols, axis=3).reshape(N * OH * OW, KH * KW * IC)
    wm = jnp.transpose(w, (2, 3, 1, 0)).reshape(KH * KW * IC, OC).astype(jnp.bfloat16)

    out2d, s, q = conv_matmul_stats(col, wm)

    M = N * OH * OW
    mean = s[0] / M
    var = jnp.maximum(q[0] / M - mean * mean, 0.0)   # clamp: E[x^2]-E[x]^2 can go < 0
    inv = gamma / jnp.sqrt(var + eps)
    scale = inv.reshape(1, OC)
    shift = (beta - mean * inv).reshape(1, OC)
    res2d = residual.reshape(M, OC) if residual is not None else None
    y2d = _bn_apply(out2d, scale, shift, relu, res2d)
    return y2d.reshape(N, OH, OW, OC)


def maxpool_3x3_s2_p1(x):
    """MaxPool2d(3, stride=2, padding=1) on NHWC via elementwise max of 9 shifted slabs."""
    N, H, W, C = x.shape
    OH = (H + 2 - 3) // 2 + 1
    OW = (W + 2 - 3) // 2 + 1
    xp = jnp.pad(x, ((0, 0), (1, 1), (1, 1), (0, 0)), constant_values=-jnp.inf)
    M = N * OH * OW
    fold = _lane_fold(M, C)
    Mf, Cf = M // fold, C * fold
    slabs = [xp[:, kh:kh + 2 * OH:2, kw:kw + 2 * OW:2, :].reshape(Mf, Cf)
             for kh in range(3) for kw in range(3)]
    tmr = _pick_div(Mf, 512)
    spec = pl.BlockSpec((tmr, Cf), lambda i: (i, 0))
    y = pl.pallas_call(
        _max9_kernel,
        out_shape=jax.ShapeDtypeStruct((Mf, Cf), jnp.float32),
        grid=(Mf // tmr,),
        in_specs=[spec] * 9,
        out_specs=spec,
        compiler_params=pltpu.CompilerParams(dimension_semantics=("parallel",)),
    )(*slabs)
    return y.reshape(N, OH, OW, C)


def adaptive_avgpool(x):
    """AdaptiveAvgPool2d((1,1)) on NHWC: (N, H, W, C) -> (N, C)."""
    N, H, W, C = x.shape
    x3 = x.reshape(N, H * W, C)
    y = pl.pallas_call(
        _avgpool_kernel,
        out_shape=jax.ShapeDtypeStruct((N, 1, C), jnp.float32),
        grid=(N,),
        in_specs=[pl.BlockSpec((1, H * W, C), lambda i: (i, 0, 0))],
        out_specs=pl.BlockSpec((1, 1, C), lambda i: (i, 0, 0)),
        compiler_params=pltpu.CompilerParams(dimension_semantics=("parallel",)),
    )(x3)
    return y.reshape(N, C)


def basic_block(x, blk):
    stride = blk["stride"]
    out = conv_bn(x, blk["conv1"], *blk["bn1"], stride=stride, padding=1, relu=True)
    if "ds_w" in blk:
        idn = conv_bn(x, blk["ds_w"], *blk["ds_bn"], stride=stride, padding=0, relu=False)
    else:
        idn = x
    out = conv_bn(out, blk["conv2"], *blk["bn2"], stride=1, padding=1,
                  relu=True, residual=idn)
    return out


def gru_forward(x, gru_params, hidden=32):
    """2-layer bidirectional GRU (batch_first); input projections via Pallas matmul,
    both directions batched into one time loop. Gate order [r, z, n] (PyTorch)."""
    batch, seq, _ = x.shape
    H = hidden
    inp = x.astype(jnp.float32)
    for layer in gru_params:
        (Wih_f, Whh_f, bih_f, bhh_f), (Wih_b, Whh_b, bih_b, bhh_b) = layer
        W_cat = jnp.concatenate([Wih_f.T, Wih_b.T], axis=1)           # (in, 6H)
        proj = pallas_matmul_small(inp.reshape(batch * seq, -1), W_cat)
        proj = proj.reshape(batch, seq, 2, 3 * H) + jnp.stack([bih_f, bih_b])
        Whh = jnp.stack([Whh_f, Whh_b])                               # (2, 3H, H)
        bhh = jnp.stack([bhh_f, bhh_b])                               # (2, 3H)
        h = jnp.zeros((2, batch, H), jnp.float32)
        outs_f = [None] * seq
        outs_b = [None] * seq
        for t in range(seq):                                          # seq <= 2 here
            gi = jnp.stack([proj[:, t, 0], proj[:, seq - 1 - t, 1]])  # (2, B, 3H)
            gh = jnp.einsum("dbh,dgh->dbg", h, Whh) + bhh[:, None, :]
            r = jax.nn.sigmoid(gi[..., :H] + gh[..., :H])
            z = jax.nn.sigmoid(gi[..., H:2 * H] + gh[..., H:2 * H])
            n = jnp.tanh(gi[..., 2 * H:] + r * gh[..., 2 * H:])
            h = (1.0 - z) * n + z * h
            outs_f[t] = h[0]
            outs_b[seq - 1 - t] = h[1]
        inp = jnp.concatenate([jnp.stack(outs_f, axis=1),
                               jnp.stack(outs_b, axis=1)], axis=-1)   # (B, seq, 2H)
    return inp


# --------------------------------------------------------------------------- #
# Deterministic synthetic parameters (shapes per module __init__)
# --------------------------------------------------------------------------- #
def _normal(key, shape, std):
    return std * jax.random.normal(key, shape, jnp.float32)


def init_params(key, num_classes=10):
    planes = [64, 128, 256, 512]          # width_per_group=64, groups=1
    keys = iter(jax.random.split(key, 64))
    p = {}
    p["conv1"] = _normal(next(keys), (planes[0], 1, 5, 5), math.sqrt(2.0 / (planes[0] * 25)))
    p["bn1"] = (jnp.ones((planes[0],), jnp.float32), jnp.zeros((planes[0],), jnp.float32))

    layers = []
    inplanes = planes[0]
    for li, ch in enumerate(planes):      # layers = [1, 1, 1, 1], BasicBlock
        stride = 1 if li == 0 else 2
        blk = {"stride": stride}
        blk["conv1"] = _normal(next(keys), (ch, inplanes, 3, 3), math.sqrt(2.0 / (ch * 9)))
        blk["bn1"] = (jnp.ones((ch,), jnp.float32), jnp.zeros((ch,), jnp.float32))
        blk["conv2"] = _normal(next(keys), (ch, ch, 3, 3), math.sqrt(2.0 / (ch * 9)))
        blk["bn2"] = (jnp.ones((ch,), jnp.float32), jnp.zeros((ch,), jnp.float32))
        if stride != 1 or inplanes != ch:
            blk["ds_w"] = _normal(next(keys), (ch, inplanes, 1, 1), math.sqrt(2.0 / ch))
            blk["ds_bn"] = (jnp.ones((ch,), jnp.float32), jnp.zeros((ch,), jnp.float32))
        layers.append([blk])
        inplanes = ch
    p["layers"] = layers

    p["alpha_w"] = _normal(next(keys), (1, 512), math.sqrt(2.0 / (512 + 1)))
    p["alpha_b"] = jnp.zeros((1,), jnp.float32)

    Hh = 32
    gru = []
    for l in range(2):
        in_sz = 512 if l == 0 else 2 * Hh
        dirs = []
        for _ in range(2):
            W_ih = _normal(next(keys), (3 * Hh, in_sz), 1.0 / math.sqrt(in_sz))
            W_hh = _normal(next(keys), (3 * Hh, Hh), 1.0 / math.sqrt(Hh))
            b_ih = jax.random.uniform(next(keys), (3 * Hh,), jnp.float32)
            b_hh = jax.random.uniform(next(keys), (3 * Hh,), jnp.float32)
            dirs.append((W_ih, W_hh, b_ih, b_hh))
        gru.append(dirs)
    p["gru"] = gru

    fc_in = planes[3] * 1 * 16 // 8       # = 1024
    p["fc_w"] = _normal(next(keys), (num_classes, fc_in), math.sqrt(2.0 / (fc_in + num_classes)))
    p["fc_b"] = jnp.zeros((num_classes,), jnp.float32)
    return p


# --------------------------------------------------------------------------- #
# Full forward pass (mirrors ResNet.forward)
# --------------------------------------------------------------------------- #
def resnet_forward(volume, params):
    B0, C0, T, H, W = volume.shape
    assert B0 == 1, "reference index_select path assumes batch dim 1"
    assert C0 == 1 and H == 128 and W == 128, "final 512x4x4 feature map is hard-coded"

    # NCDHW -> per-frame NHWC
    x = jnp.transpose(volume, (0, 2, 3, 4, 1)).reshape(B0 * T, H, W, C0)

    x = conv_bn(x, params["conv1"], *params["bn1"], stride=2, padding=2, relu=True)
    x = maxpool_3x3_s2_p1(x)
    for layer in params["layers"]:
        for blk in layer:
            x = basic_block(x, blk)                      # -> (B0*T, 4, 4, 512) NHWC

    Nt, FH, FW, C = x.shape
    BX1 = adaptive_avgpool(x)                            # (Nt, 512)
    alpha = jax.nn.sigmoid(
        pallas_matmul_small(BX1, params["alpha_w"].T) + params["alpha_b"])
    BX2 = BX1 * alpha
    BXwhole = BX2.reshape(B0, T, C).sum(axis=1)          # (B0, 512)

    BX1n = BX1 / jnp.clip(jnp.linalg.norm(BX1, axis=1, keepdims=True), 1e-12)
    BXwn = BXwhole / jnp.clip(jnp.linalg.norm(BXwhole, axis=1, keepdims=True), 1e-12)
    Bw = pallas_matmul_small(BX1n, BXwn.T).reshape(B0, T)

    # BinarizedF: per-row mean threshold. Only 2 elements -> plain jnp (no kernel launch).
    Bmask = jnp.where(Bw >= jnp.mean(Bw, axis=1, keepdims=True), 1.0, 0.0)

    x5 = x.reshape(B0, T, FH, FW, C) * Bmask[:, :, None, None, None]
    # TODO(synk): data-dependent index_select runs on host (device->host sync, not jittable).
    idx = np.nonzero(np.asarray(Bmask[0]) == 1.0)[0]
    if idx.size == 0:                                    # guard: keep all frames
        idx = np.arange(T)
    xBO = x5[:, idx]                                     # (B0, K, 4, 4, 512)
    xBO = jnp.transpose(xBO, (0, 2, 3, 1, 4))            # (B0, 4, 4, K, 512)
    Ksel = xBO.shape[3]
    xBO = xBO.reshape(-1, Ksel, C)                       # (16, K, 512)

    out = gru_forward(xBO, params["gru"])                # (16, K, 64)
    out = jnp.mean(out, axis=1)                          # (16, 64)
    out = out.reshape(-1, FH * FW * 64)                  # (1, 1024)
    # TODO(synk): nn.Dropout(0.5) treated as eval-mode identity (no RNG in spec).
    out = pallas_matmul_small(out, params["fc_w"].T) + params["fc_b"]
    return Bw, Bmask, out


# --------------------------------------------------------------------------- #
if __name__ == "__main__":
    key = jax.random.PRNGKey(0)
    k_in, k_par = jax.random.split(key)
    # Volume: (batch=1, channels=1, T=2, H=128, W=128) — H=W=128 is required so the
    # backbone ends at 512x4x4 exactly as the module's hard-coded reshapes assume.
    volume = jax.random.normal(k_in, (1, 1, 2, 128, 128), jnp.float32)
    params = init_params(k_par, num_classes=10)

    Bw, Bmask, out = resnet_forward(volume, params)
    jax.block_until_ready((Bw, Bmask, out))
    assert Bw.shape == (1, 2) and Bmask.shape == (1, 2) and out.shape == (1, 10)
    print("KERNEL_OK")
</pallas_src>

<mosaic_0001>
module attributes {stable_mosaic.version = 11 : i64} {
  func.func @_matmul_stats_kernel(%arg0: i32, %arg1: i32, %arg2: memref<256x25xbf16, #tpu.memory_space<vmem>>, %arg3: memref<25x64xbf16, #tpu.memory_space<vmem>>, %arg4: memref<256x64xf32, #tpu.memory_space<vmem>>, %arg5: memref<1x64xf32, #tpu.memory_space<vmem>>, %arg6: memref<1x64xf32, #tpu.memory_space<vmem>>) attributes {dimension_semantics = [#tpu.dimension_semantics<parallel>, #tpu.dimension_semantics<arbitrary>], iteration_bounds = array<i64: 1, 32>, scalar_prefetch = 0 : i64, scratch_operands = 0 : i64, tpu.core_type = #tpu.core_type<tc>, window_params = [{transform_indices = @transform_0, window_bounds = array<i64: 256, 25>}, {transform_indices = @transform_1, window_bounds = array<i64: 25, 64>}, {transform_indices = @transform_2, window_bounds = array<i64: 256, 64>}, {transform_indices = @transform_3, window_bounds = array<i64: 1, 64>}, {transform_indices = @transform_4, window_bounds = array<i64: 1, 64>}]} {
    %c0_i32 = arith.constant 0 : i32
    %0 = arith.cmpi eq, %arg1, %c0_i32 : i32
    %1 = arith.extui %0 : i1 to i32
    %c0_i32_0 = arith.constant 0 : i32
    %2 = arith.cmpi ne, %1, %c0_i32_0 : i32
    scf.if %2 {
      %cst_16 = arith.constant 0.000000e+00 : f32
      %18 = vector.broadcast %cst_16 : f32 to vector<1x64xf32>
      %c0_17 = arith.constant 0 : index
      %c0_18 = arith.constant 0 : index
      %19 = vector.load %arg5[%c0_17, %c0_18] : memref<1x64xf32, #tpu.memory_space<vmem>>, vector<1x64xf32>
      tpu.vector_store %arg5[%c0_17, %c0_18], %18 {strides = array<i32>} : memref<1x64xf32, #tpu.memory_space<vmem>>, vector<1x64xf32>,
      %cst_19 = arith.constant 0.000000e+00 : f32
      %20 = vector.broadcast %cst_19 : f32 to vector<1x64xf32>
      %c0_20 = arith.constant 0 : index
      %c0_21 = arith.constant 0 : index
      %21 = vector.load %arg6[%c0_20, %c0_21] : memref<1x64xf32, #tpu.memory_space<vmem>>, vector<1x64xf32>
      tpu.vector_store %arg6[%c0_20, %c0_21], %20 {strides = array<i32>} : memref<1x64xf32, #tpu.memory_space<vmem>>, vector<1x64xf32>,
    } else {
    }
    %c0 = arith.constant 0 : index
    %c0_1 = arith.constant 0 : index
    %3 = vector.load %arg2[%c0, %c0_1] : memref<256x25xbf16, #tpu.memory_space<vmem>>, vector<256x25xbf16>
    %c0_2 = arith.constant 0 : index
    %c0_3 = arith.constant 0 : index
    %4 = vector.load %arg3[%c0_2, %c0_3] : memref<25x64xbf16, #tpu.memory_space<vmem>>, vector<25x64xbf16>
    %cst = arith.constant dense<0.000000e+00> : vector<256x64xf32>
    %5 = tpu.matmul %3, %4, %cst {dimension_numbers = #tpu.dot_dimension_numbers<[1], [0], [0], [1], [0, 0, 1, 1], [], []>} : vector<256x25xbf16>, vector<25x64xbf16>, vector<256x64xf32> -> vector<256x64xf32>
    %c0_4 = arith.constant 0 : index
    %c0_5 = arith.constant 0 : index
    %6 = vector.load %arg4[%c0_4, %c0_5] : memref<256x64xf32, #tpu.memory_space<vmem>>, vector<256x64xf32>
    tpu.vector_store %arg4[%c0_4, %c0_5], %5 {strides = array<i32>} : memref<256x64xf32, #tpu.memory_space<vmem>>, vector<256x64xf32>,
    %c0_6 = arith.constant 0 : index
    %c0_7 = arith.constant 0 : index
    %7 = vector.load %arg5[%c0_6, %c0_7] : memref<1x64xf32, #tpu.memory_space<vmem>>, vector<1x64xf32>
    %cst_8 = arith.constant dense<0.000000e+00> : vector<64xf32>
    %8 = vector.multi_reduction <add>, %5, %cst_8 [0] : vector<256x64xf32> to vector<64xf32>
    %9 = vector.shape_cast %8 : vector<64xf32> to vector<1x64xf32>
    %10 = arith.addf %7, %9 : vector<1x64xf32>
    %c0_9 = arith.constant 0 : index
    %c0_10 = arith.constant 0 : index
    %11 = vector.load %arg5[%c0_9, %c0_10] : memref<1x64xf32, #tpu.memory_space<vmem>>, vector<1x64xf32>
    tpu.vector_store %arg5[%c0_9, %c0_10], %10 {strides = array<i32>} : memref<1x64xf32, #tpu.memory_space<vmem>>, vector<1x64xf32>,
    %c0_11 = arith.constant 0 : index
    %c0_12 = arith.constant 0 : index
    %12 = vector.load %arg6[%c0_11, %c0_12] : memref<1x64xf32, #tpu.memory_space<vmem>>, vector<1x64xf32>
    %13 = arith.mulf %5, %5 : vector<256x64xf32>
    %cst_13 = arith.constant dense<0.000000e+00> : vector<64xf32>
    %14 = vector.multi_reduction <add>, %13, %cst_13 [0] : vector<256x64xf32> to vector<64xf32>
    %15 = vector.shape_cast %14 : vector<64xf32> to vector<1x64xf32>
    %16 = arith.addf %12, %15 : vector<1x64xf32>
    %c0_14 = arith.constant 0 : index
    %c0_15 = arith.constant 0 : index
    %17 = vector.load %arg6[%c0_14, %c0_15] : memref<1x64xf32, #tpu.memory_space<vmem>>, vector<1x64xf32>
    tpu.vector_store %arg6[%c0_14, %c0_15], %16 {strides = array<i32>} : memref<1x64xf32, #tpu.memory_space<vmem>>, vector<1x64xf32>,
    return
  }
  func.func @transform_0(%arg0: i32, %arg1: i32) -> (i32, i32) {
    %c0_i32 = arith.constant 0 : i32
    %c0_i32_0 = arith.constant 0 : i32
    return %arg1, %c0_i32 : i32, i32
  }
  func.func @transform_1(%arg0: i32, %arg1: i32) -> (i32, i32) {
    %c0_i32 = arith.constant 0 : i32
    %c0_i32_0 = arith.constant 0 : i32
    return %c0_i32, %arg0 : i32, i32
  }
  func.func @transform_2(%arg0: i32, %arg1: i32) -> (i32, i32) {
    %c0_i32 = arith.constant 0 : i32
    return %arg1, %arg0 : i32, i32
  }
  func.func @transform_3(%arg0: i32, %arg1: i32) -> (i32, i32) {
    %c0_i32 = arith.constant 0 : i32
    %c0_i32_0 = arith.constant 0 : i32
    return %c0_i32, %arg0 : i32, i32
  }
  func.func @transform_4(%arg0: i32, %arg1: i32) -> (i32, i32) {
    %c0_i32 = arith.constant 0 : i32
    %c0_i32_0 = arith.constant 0 : i32
    return %c0_i32, %arg0 : i32, i32
  }
}

</mosaic_0001>

<llo_original>
// kernel: tpu_custom_call.1
$region0: #{tpu_custom_call.1}
  #allocation0 [shape = 'u32[]', space=smem, size = 0x4, offset = 0x4, fixed_abs, tag = 'smem constant byte address 0x4 - core index']
  #allocation1 [shape = 'u32[144,128]{1,0:T(1,128)}', space=vmem, size = 0x12000, scoped, tag = 'internal scratch']
  %s0 = inlined_call_operand.vmem [shape: bf16[8192,25], index: 0, kind: input, shape index: {}]
  %s1 = inlined_call_operand.vmem [shape: bf16[25,64], index: 1, kind: input, shape index: {}]
  %s2 = inlined_call_operand.vmem [shape: f32[8192,64], index: 2, kind: output, shape index: {0}]
  %s3 = inlined_call_operand.hbm [shape: f32[1,64], index: 3, kind: output, shape index: {1}]
  %s4 = inlined_call_operand.hbm [shape: f32[1,64], index: 4, kind: output, shape index: {2}]
  %5 = xla_tuple %s2, %s3, %s4
  %s6 = sld [smem:[#allocation0]]
  $region61: #{tpu_custom_call.1} parent=0
    _
  %s8 = ssub.s32 1, %s6
  %s9 = scalar_select 0, %s8, %s6
  $region1: #{tpu_custom_call.1} parent=0
    #allocation2 [shape = 'u8[512]{0}', space=vmem, size = 0x400, scoped, tag = 'output window, operand 1, single buffered']
    #allocation3 [shape = 's32[2]{0}', space=sflag, size = 0x8, scoped, tag = 'scoped memory for tpu_custom_call.1']
    #allocation4 [shape = 'u8[512]{0}', space=vmem, size = 0x400, scoped, tag = 'output window, operand 2, single buffered']
    #allocation5 [shape = 's32[1]{0}', space=sflag, size = 0x4, scoped, tag = 'scoped memory for tpu_custom_call.1']
    %10 = vsyncpa [#allocation3], 0
    %11 = vsyncpa [#allocation5], 0
    loop: start=0, step=1, limit=34
    $region2: #{tpu_custom_call.1} parent=1 // loop_pre_header
      _
    $region3: #{tpu_custom_call.1} parent=1 // loop_header
      %s13 = sphi 0, %s17
      %p14 = scmp.ge.s32.totalorder %s13, 34
      %s20 = sphi 0, %s32
      %s21 = sphi 0, %s28
      %s22 = sphi 0, %s20
      %s23 = sphi 0, %s21
      %s24 = sphi 0, %s22
      %s25 = sphi 0, %s23
      %s35 = sphi 0, %s37
      %s38 = sphi 0, %s35
      %s39 = sphi 0, %s38
      %s55 = sphi 0, %s39
      %s61 = sphi 0, %s63
      %s64 = sphi 0, %s61
      %s65 = sphi 0, %s64
      %s81 = sphi 0, %s65
      %s89 = sphi 0, %s91
      %s92 = sphi 0, %s89
      %s93 = sphi 0, %s92
      %s109 = sphi 0, %s93
      %s115 = sphi 0, %s117
      %s118 = sphi 0, %s115
      %s119 = sphi 0, %s118
      %s135 = sphi 0, %s119
      %s141 = sphi 0, %s143
      %s144 = sphi 0, %s141
      %s145 = sphi 0, %s144
      %s161 = sphi 0, %s145
    $region4: #{tpu_custom_call.1} parent=1 // loop_header_branch
      %16 = sbr.rel (%p14) target = $region8
    $region5: #{tpu_custom_call.1} parent=1 // loop_body
      %s18 = ssub.s32 %s13, 1
      %s19 = ssub.s32 %s13, 2
      %s26 = sadd.s32 1, %s21
      %p27 = scmp.ge.s32.totalorder %s26, 32
      %s28 = scalar_select %p27, 0, %s26
      %s29 = sadd.s32 1, %s20
      %s30 = scalar_select %p27, %s29, %s20
      %p31 = scmp.ge.s32.totalorder %s30, 1
      %s32 = scalar_select %p31, 0, %s30
      %s33 = ssub.s32 %s21, %s28
      %p34 = scmp.eq.s32.totalorder %s33, 0
      %s36 = sadd.s32 %s35, 1
      %s37 = scalar_select %p34, %s35, %s36
      %p40 = pneg %p34
      %p41 = scmp.eq.s32.totalorder %s13, 31
      %p42 = por %p40, %p41
      %p43 = scmp.ne.s32.totalorder %s35, %s38
      %p44 = scmp.eq.s32.totalorder %s13, 0
      %p45 = por %p43, %p44
      %p46 = scmp.ne.s32.totalorder %s35, %s38
      %p47 = scmp.eq.s32.totalorder %s18, 31
      %p48 = por %p46, %p47
      %p49 = scmp.ne.s32.totalorder %s38, %s39
      %p50 = scmp.eq.s32.totalorder %s18, 0
      %p51 = por %p49, %p50
      %p52 = scmp.ne.s32.totalorder %s38, %s39
      %p53 = scmp.eq.s32.totalorder %s19, 31
      %p54 = por %p52, %p53
      %p56 = scmp.ne.s32.totalorder %s39, %s55
      %p57 = scmp.eq.s32.totalorder %s19, 0
      %p58 = por %p56, %p57
      %s59 = ssub.s32 %s20, %s32
      %p60 = scmp.eq.s32.totalorder %s59, 0
      %s62 = sadd.s32 %s61, 1
      %s63 = scalar_select %p60, %s61, %s62
      %p66 = pneg %p60
      %p67 = scmp.eq.s32.totalorder %s13, 31
      %p68 = por %p66, %p67
      %p69 = scmp.ne.s32.totalorder %s61, %s64
      %p70 = scmp.eq.s32.totalorder %s13, 0
      %p71 = por %p69, %p70
      %p72 = scmp.ne.s32.totalorder %s61, %s64
      %p73 = scmp.eq.s32.totalorder %s18, 31
      %p74 = por %p72, %p73
      %p75 = scmp.ne.s32.totalorder %s64, %s65
      %p76 = scmp.eq.s32.totalorder %s18, 0
      %p77 = por %p75, %p76
      %p78 = scmp.ne.s32.totalorder %s64, %s65
      %p79 = scmp.eq.s32.totalorder %s19, 31
      %p80 = por %p78, %p79
      %p82 = scmp.ne.s32.totalorder %s65, %s81
      %p83 = scmp.eq.s32.totalorder %s19, 0
      %p84 = por %p82, %p83
      %s85 = ssub.s32 %s21, %s28
      %s86 = ssub.s32 %s20, %s32
      %s87 = sor.u32 %s85, %s86
      %p88 = scmp.eq.s32.totalorder %s87, 0
      %s90 = sadd.s32 %s89, 1
      %s91 = scalar_select %p88, %s89, %s90
      %p94 = pneg %p88
      %p95 = scmp.eq.s32.totalorder %s13, 31
      %p96 = por %p94, %p95
      %p97 = scmp.ne.s32.totalorder %s89, %s92
      %p98 = scmp.eq.s32.totalorder %s13, 0
      %p99 = por %p97, %p98
      %p100 = scmp.ne.s32.totalorder %s89, %s92
      %p101 = scmp.eq.s32.totalorder %s18, 31
      %p102 = por %p100, %p101
      %p103 = scmp.ne.s32.totalorder %s92, %s93
      %p104 = scmp.eq.s32.totalorder %s18, 0
      %p105 = por %p103, %p104
      %p106 = scmp.ne.s32.totalorder %s92, %s93
      %p107 = scmp.eq.s32.totalorder %s19, 31
      %p108 = por %p106, %p107
      %p110 = scmp.ne.s32.totalorder %s93, %s109
      %p111 = scmp.eq.s32.totalorder %s19, 0
      %p112 = por %p110, %p111
      %s113 = ssub.s32 %s20, %s32
      %p114 = scmp.eq.s32.totalorder %s113, 0
      %s116 = sadd.s32 %s115, 1
      %s117 = scalar_select %p114, %s115, %s116
      %p120 = pneg %p114
      %p121 = scmp.eq.s32.totalorder %s13, 31
      %p122 = por %p120, %p121
      %p123 = scmp.ne.s32.totalorder %s115, %s118
      %p124 = scmp.eq.s32.totalorder %s13, 0
      %p125 = por %p123, %p124
      %p126 = scmp.ne.s32.totalorder %s115, %s118
      %p127 = scmp.eq.s32.totalorder %s18, 31
      %p128 = por %p126, %p127
      %p129 = scmp.ne.s32.totalorder %s118, %s119
      %p130 = scmp.eq.s32.totalorder %s18, 0
      %p131 = por %p129, %p130
      %p132 = scmp.ne.s32.totalorder %s118, %s119
      %p133 = scmp.eq.s32.totalorder %s19, 31
      %p134 = por %p132, %p133
      %p136 = scmp.ne.s32.totalorder %s119, %s135
      %p137 = scmp.eq.s32.totalorder %s19, 0
      %p138 = por %p136, %p137
      %s139 = ssub.s32 %s20, %s32
      %p140 = scmp.eq.s32.totalorder %s139, 0
      %s142 = sadd.s32 %s141, 1
      %s143 = scalar_select %p140, %s141, %s142
      %p146 = pneg %p140
      %p147 = scmp.eq.s32.totalorder %s13, 31
      %p148 = por %p146, %p147
      %p149 = scmp.ne.s32.totalorder %s141, %s144
      %p150 = scmp.eq.s32.totalorder %s13, 0
      %p151 = por %p149, %p150
      %p152 = scmp.ne.s32.totalorder %s141, %s144
      %p153 = scmp.eq.s32.totalorder %s18, 31
      %p154 = por %p152, %p153
      %p155 = scmp.ne.s32.totalorder %s144, %s145
      %p156 = scmp.eq.s32.totalorder %s18, 0
      %p157 = por %p155, %p156
      %p158 = scmp.ne.s32.totalorder %s144, %s145
      %p159 = scmp.eq.s32.totalorder %s19, 31
      %p160 = por %p158, %p159
      %p162 = scmp.ne.s32.totalorder %s145, %s161
      %p163 = scmp.eq.s32.totalorder %s19, 0
      %p164 = por %p162, %p163
      %p165 = scmp.le.s32.totalorder 1, %s13
      %p166 = scmp.lt.s32.totalorder %s13, 33
      %p167 = pnand %p165, %p166
      %p168 = pneg %p167
      // Predicated region
      $region9: #{tpu_custom_call.1} parent=5 // pred_check
        _
      $region10: #{tpu_custom_call.1} parent=5 // pred_check_branch
        %170 = sbr.rel (%p167) target = $region12
      $region11: #{tpu_custom_call.1} parent=5 // pred_region
        %s171 = ssub.s32 %s13, 1
        // Predicated region
        $region13: #{tpu_custom_call.1} parent=11 // pred_check
          %p172 = pneg %p77
        $region14: #{tpu_custom_call.1} parent=11 // pred_check_branch
          %174 = sbr.rel (%p172) target = $region16
        $region15: #{tpu_custom_call.1} parent=11 // pred_region
          %p175 = scmp.lt.s32.totalorder %s22, 0
          %s176 = scalar_select %p175, %s22, 0
          %s177 = smul.addr %s176, 4
          %s178 = scalar_lea.vmem %s1, %s177
        $region16: #{tpu_custom_call.1} parent=11 // pred_fallthru
          _
      $region12: #{tpu_custom_call.1} parent=5 // pred_fallthru
        _
      %p179 = scmp.lt.s32.totalorder %s13, 32
      // Predicated region
      $region17: #{tpu_custom_call.1} parent=5 // pred_check
        %p180 = pneg %p179
      $region18: #{tpu_custom_call.1} parent=5 // pred_check_branch
        %182 = sbr.rel (%p180) target = $region20
      $region19: #{tpu_custom_call.1} parent=5 // pred_region
        // Predicated region
        $region21: #{tpu_custom_call.1} parent=19 // pred_check
          %p183 = pneg %p45
        $region22: #{tpu_custom_call.1} parent=19 // pred_check_branch
          %185 = sbr.rel (%p183) target = $region24
        $region23: #{tpu_custom_call.1} parent=19 // pred_region
          %s186 = smul.u32 32, %s21
          %p187 = scmp.lt.s32.totalorder %s186, 1023
          %s188 = scalar_select %p187, %s186, 1023
          %s189 = smul.addr %s188, 4
          %s190 = scalar_lea.vmem %s0, %s189
          %s191 = smul.u32 32, %s21
        $region24: #{tpu_custom_call.1} parent=19 // pred_fallthru
          _
      $region20: #{tpu_custom_call.1} parent=5 // pred_fallthru
        _
      %p192 = scmp.le.s32.totalorder 1, %s13
      %p193 = scmp.lt.s32.totalorder %s13, 33
      %p194 = pnand %p192, %p193
      %p195 = pneg %p194
      // Predicated region
      $region25: #{tpu_custom_call.1} parent=5 // pred_check
        _
      $region26: #{tpu_custom_call.1} parent=5 // pred_check_branch
        %197 = sbr.rel (%p194) target = $region28
      $region27: #{tpu_custom_call.1} parent=5 // pred_region
        %s198 = ssub.s32 %s13, 1
        %s199 = smul.u32 32, %s23
        %p200 = scmp.lt.s32.totalorder %s199, 1023
        %s201 = scalar_select %p200, %s199, 1023
        %s202 = smul.addr %s201, 4
        %s203 = scalar_lea.vmem %s0, %s202
        %p204 = pneg %p51
        %p205 = pneg %p48
        %p206 = scmp.lt.s32.totalorder %s22, 0
        %s207 = scalar_select %p206, %s22, 0
        %s208 = smul.addr %s207, 4
        %s209 = scalar_lea.vmem %s1, %s208
        %p210 = pneg %p77
        %p211 = pneg %p74
        %p212 = pneg %p105
        %p213 = pneg %p102
        %s214 = smul.u32 32, %s23
        %p215 = scmp.lt.s32.totalorder %s214, 1023
        %s216 = scalar_select %p215, %s214, 1023
        %p217 = scmp.lt.s32.totalorder %s22, 0
        %s218 = scalar_select %p217, %s22, 0
        %s219 = sadd.s32 %s218, %s216
        %s220 = smul.addr %s219, 8
        %s221 = scalar_lea.vmem %s2, %s220
        %p222 = pneg %p131
        %p223 = pneg %p128
        %p224 = pneg %p157
        %p225 = pneg %p154
        %s226 = smul.u32 32, %s23
        %p227 = scmp.lt.s32.totalorder %s226, 1023
        %s228 = scalar_select %p227, %s226, 1023
        %s229 = smul.addr %s228, 4
        %s230 = scalar_lea.vmem %s0, %s229
        %s231 = smul.u32 32, %s23
        %p232 = scmp.lt.s32.totalorder %s22, 0
        %s233 = scalar_select %p232, %s22, 0
        %s234 = smul.addr %s233, 4
        %s235 = scalar_lea.vmem %s1, %s234
        %s236 = smul.u32 32, %s23
        %p237 = scmp.lt.s32.totalorder %s236, 1023
        %s238 = scalar_select %p237, %s236, 1023
        %p239 = scmp.lt.s32.totalorder %s22, 0
        %s240 = scalar_select %p239, %s22, 0
        %s241 = sadd.s32 %s240, %s238
        %s242 = smul.addr %s241, 8
        %s243 = scalar_lea.vmem %s2, %s242
        %s244 = smul.u32 32, %s23
        %p246 = scmp.eq.s32.totalorder %s23, 0
        // Predicated region
        $region29: #{tpu_custom_call.1} parent=27 // pred_check
          %p247 = pneg %p246
        $region30: #{tpu_custom_call.1} parent=27 // pred_check_branch
          %249 = sbr.rel (%p247) target = $region32
        $region31: #{tpu_custom_call.1} parent=27 // pred_region
          %vm250 = vcmask 516096
          %251 = vst.msk [vmem:[#allocation2] sm:$0x1] %vm250, 0.0
          %252 = vst.msk [vmem:[#allocation4] sm:$0x1] %vm250, 0.0
        $region32: #{tpu_custom_call.1} parent=27 // pred_fallthru
          _
        %v253 = vld [vmem:[%s230] sm:$0xf]
        %v254 = vld [vmem:[%s230 + $0x4] sm:$0xf]
        %v255 = vld [vmem:[%s230 + $0x8] sm:$0xf]
        %v256 = vld [vmem:[%s230 + $0xc] sm:$0xf]
        %v257 = vld [vmem:[%s230 + $0x10] sm:$0xf]
        %v258 = vld [vmem:[%s230 + $0x14] sm:$0xf]
        %v259 = vld [vmem:[%s230 + $0x18] sm:$0xf]
        %v260 = vld [vmem:[%s230 + $0x1c] sm:$0xf]
        %v261 = vld [vmem:[%s230 + $0x20] sm:$0xf]
        %v262 = vld [vmem:[%s230 + $0x24] sm:$0xf]
        %v263 = vld [vmem:[%s230 + $0x28] sm:$0xf]
        %v264 = vld [vmem:[%s230 + $0x2c] sm:$0xf]
        %v265 = vld [vmem:[%s230 + $0x30] sm:$0xf]
        %v266 = vld [vmem:[%s230 + $0x34] sm:$0xf]
        %v267 = vld [vmem:[%s230 + $0x38] sm:$0xf]
        %v268 = vld [vmem:[%s230 + $0x3c] sm:$0xf]
        %v269 = vld [vmem:[%s230 + $0x40] sm:$0xf]
        %v270 = vld [vmem:[%s230 + $0x44] sm:$0xf]
        %v271 = vld [vmem:[%s230 + $0x48] sm:$0xf]
        %v272 = vld [vmem:[%s230 + $0x4c] sm:$0xf]
        %v273 = vld [vmem:[%s230 + $0x50] sm:$0xf]
        %v274 = vld [vmem:[%s230 + $0x54] sm:$0xf]
        %v275 = vld [vmem:[%s230 + $0x58] sm:$0xf]
        %v276 = vld [vmem:[%s230 + $0x5c] sm:$0xf]
        %v277 = vld [vmem:[%s230 + $0x60] sm:$0xf]
        %v278 = vld [vmem:[%s230 + $0x64] sm:$0xf]
        %v279 = vld [vmem:[%s230 + $0x68] sm:$0xf]
        %v280 = vld [vmem:[%s230 + $0x6c] sm:$0xf]
        %v281 = vld [vmem:[%s230 + $0x70] sm:$0xf]
        %v282 = vld [vmem:[%s230 + $0x74] sm:$0xf]
        %v283 = vld [vmem:[%s230 + $0x78] sm:$0xf]
        %v284 = vld [vmem:[%s230 + $0x7c] sm:$0xf]
        %v285 = vld [vmem:[%s235] sm:$0xf]
        %v286 = vld [vmem:[%s235 + $0x4] sm:$0xf]
        %v287 = vld [vmem:[%s235 + $0x8] sm:$0xf]
        %v288 = vld [vmem:[%s235 + $0xc] sm:$0x1]
        %v321 = vunpack.c.l.b16 %v253
        %v322 = vunpack.c.l.b16 %v254
        %v323 = vunpack.c.l.b16 %v255
        %v324 = vunpack.c.l.b16 %v256
        %v325 = vunpack.c.l.b16 %v257
        %v326 = vunpack.c.l.b16 %v258
        %v327 = vunpack.c.l.b16 %v259
        %v328 = vunpack.c.l.b16 %v260
        %v329 = vunpack.c.l.b16 %v261
        %v330 = vunpack.c.l.b16 %v262
        %v331 = vunpack.c.l.b16 %v263
        %v332 = vunpack.c.l.b16 %v264
        %v333 = vunpack.c.l.b16 %v265
        %v334 = vunpack.c.l.b16 %v266
        %v335 = vunpack.c.l.b16 %v267
        %v336 = vunpack.c.l.b16 %v268
        %v337 = vunpack.c.l.b16 %v269
        %v338 = vunpack.c.l.b16 %v270
        %v339 = vunpack.c.l.b16 %v271
        %v340 = vunpack.c.l.b16 %v272
        %v341 = vunpack.c.l.b16 %v273
        %v342 = vunpack.c.l.b16 %v274
        %v343 = vunpack.c.l.b16 %v275
        %v344 = vunpack.c.l.b16 %v276
        %v345 = vunpack.c.l.b16 %v277
        %v346 = vunpack.c.l.b16 %v278
        %v347 = vunpack.c.l.b16 %v279
        %v348 = vunpack.c.l.b16 %v280
        %v349 = vunpack.c.l.b16 %v281
        %v350 = vunpack.c.l.b16 %v282
        %v351 = vunpack.c.l.b16 %v283
        %v352 = vunpack.c.l.b16 %v284
        %v353 = vpack.c.b16 %v322, %v321
        %v354 = vpack.c.b16 %v324, %v323
        %v355 = vpack.c.b16 %v326, %v325
        %v356 = vpack.c.b16 %v328, %v327
        %v357 = vpack.c.b16 %v330, %v329
        %v358 = vpack.c.b16 %v332, %v331
        %v359 = vpack.c.b16 %v334, %v333
        %v360 = vpack.c.b16 %v336, %v335
        %v361 = vpack.c.b16 %v338, %v337
        %v362 = vpack.c.b16 %v340, %v339
        %v363 = vpack.c.b16 %v342, %v341
        %v364 = vpack.c.b16 %v344, %v343
        %v365 = vpack.c.b16 %v346, %v345
        %v366 = vpack.c.b16 %v348, %v347
        %v367 = vpack.c.b16 %v350, %v349
        %v368 = vpack.c.b16 %v352, %v351
        %v373 = vunpack.c.l.b16 %v285
        %v374 = vunpack.c.l.b16 %v286
        %v375 = vunpack.c.l.b16 %v287
        %v376 = vunpack.c.l.b16 %v288
        %v377 = vpack.c.b16 %v374, %v373
        %v378 = vpack.c.b16 %v376, %v375
        %vm380 = vcmask 203776
        %v382 = vsel %vm380, %v353, 0
        %v385 = vsel %vm380, %v354, 0
        %v388 = vsel %vm380, %v355, 0
        %v391 = vsel %vm380, %v356, 0
        %v394 = vsel %vm380, %v357, 0
        %v397 = vsel %vm380, %v358, 0
        %v400 = vsel %vm380, %v359, 0
        %v403 = vsel %vm380, %v360, 0
        %v406 = vsel %vm380, %v361, 0
        %v409 = vsel %vm380, %v362, 0
        %v412 = vsel %vm380, %v363, 0
        %v415 = vsel %vm380, %v364, 0
        %v418 = vsel %vm380, %v365, 0
        %v421 = vsel %vm380, %v366, 0
        %v424 = vsel %vm380, %v367, 0
        %v427 = vsel %vm380, %v368, 0
        %vm429 = vcmask 1043456
        %vm430 = vcmask 1044480
        %v431 = vsel %vm429, 4294967295, 65535
        %v432 = vsel %vm430, %v431, 0
        %v434 = vand.u32 %v378, %v432
        %436 = vmatprep.subr.bf16.mxu0 0
        %437 = vmatpush1.bf16.msra.mxu0 %v377
        %438 = vmatprep.subr.bf16.mxu0 0
        %439 = vmatpush1.bf16.msra.mxu0 %v434
        %440 = vmatprep.subr.bf16.mxu0 0
        %441 = vmatpush1.bf16.msra.mxu0 0
        %442 = vmatprep.subr.bf16.mxu0 0
        %443 = vmatpush1.bf16.msra.mxu0 0
        %444 = vmatprep.subr.bf16.mxu0 0
        %445 = vmatpush1.bf16.msra.mxu0 0
        %446 = vmatprep.subr.bf16.mxu0 0
        %447 = vmatpush1.bf16.msra.mxu0 0
        %448 = vmatprep.subr.bf16.mxu0 0
        %449 = vmatpush1.bf16.msra.mxu0 0
        %450 = vmatprep.subr.bf16.mxu0 0
        %451 = vmatpush1.bf16.msra.mxu0 0
        %452 = vmatprep.subr.bf16.mxu0 0
        %453 = vmatpush1.bf16.msra.mxu0 0
        %454 = vmatprep.subr.bf16.mxu0 0
        %455 = vmatpush1.bf16.msra.mxu0 0
        %456 = vmatprep.subr.bf16.mxu0 0
        %457 = vmatpush1.bf16.msra.mxu0 0
        %458 = vmatprep.subr.bf16.mxu0 0
        %459 = vmatpush1.bf16.msra.mxu0 0
        %460 = vmatprep.subr.bf16.mxu0 0
        %461 = vmatpush1.bf16.msra.mxu0 0
        %462 = vmatprep.subr.bf16.mxu0 0
        %463 = vmatpush1.bf16.msra.mxu0 0
        %464 = vmatprep.subr.bf16.mxu0 0
        %465 = vmatpush1.bf16.msra.mxu0 0
        %466 = vmatprep.subr.bf16.mxu0 0
        %467 = vmatpush1.bf16.msra.mxu0 0
        %468 = vmatprep.mubr.bf16.mxu0 0
        %469 = vmatmul.mubr.bf16.gmra.mrb[0].mxu0 %v382
        %v470 = vpop.f32.mrb[0].mxu0
        %v471 = vadd.f32 0.0, %v470
        %v472 = vpop.f32.mrb[0].mxu0
        %v473 = vpop.f32.mrb[0].mxu0
        %v474 = vadd.f32 0.0, %v473
        %v475 = vpop.f32.mrb[0].mxu0
        %476 = vmatprep.mubr.bf16.mxu0 0
        %477 = vmatmul.mubr.bf16.gmra.mrb[0].mxu0 %v385
        %v478 = vpop.f32.mrb[0].mxu0
        %v479 = vadd.f32 0.0, %v478
        %v480 = vpop.f32.mrb[0].mxu0
        %v481 = vpop.f32.mrb[0].mxu0
        %v482 = vadd.f32 0.0, %v481
        %v483 = vpop.f32.mrb[0].mxu0
        %484 = vmatprep.mubr.bf16.mxu0 0
        %485 = vmatmul.mubr.bf16.gmra.mrb[0].mxu0 %v388
        %v486 = vpop.f32.mrb[0].mxu0
        %v487 = vadd.f32 0.0, %v486
        %v488 = vpop.f32.mrb[0].mxu0
        %v489 = vpop.f32.mrb[0].mxu0
        %v490 = vadd.f32 0.0, %v489
        %v491 = vpop.f32.mrb[0].mxu0
        %492 = vmatprep.mubr.bf16.mxu0 0
        %493 = vmatmul.mubr.bf16.gmra.mrb[0].mxu0 %v391
        %v494 = vpop.f32.mrb[0].mxu0
        %v495 = vadd.f32 0.0, %v494
        %v496 = vpop.f32.mrb[0].mxu0
        %v497 = vpop.f32.mrb[0].mxu0
        %v498 = vadd.f32 0.0, %v497
        %v499 = vpop.f32.mrb[0].mxu0
        %500 = vmatprep.mubr.bf16.mxu0 0
        %501 = vmatmul.mubr.bf16.gmra.mrb[0].mxu0 %v394
        %v502 = vpop.f32.mrb[0].mxu0
        %v503 = vadd.f32 0.0, %v502
        %v504 = vpop.f32.mrb[0].mxu0
        %v505 = vpop.f32.mrb[0].mxu0
        %v506 = vadd.f32 0.0, %v505
        %v507 = vpop.f32.mrb[0].mxu0
        %508 = vmatprep.mubr.bf16.mxu0 0
        %509 = vmatmul.mubr.bf16.gmra.mrb[0].mxu0 %v397
        %v510 = vpop.f32.mrb[0].mxu0
        %v511 = vadd.f32 0.0, %v510
        %v512 = vpop.f32.mrb[0].mxu0
        %v513 = vpop.f32.mrb[0].mxu0
        %v514 = vadd.f32 0.0, %v513
        %v515 = vpop.f32.mrb[0].mxu0
        %516 = vmatprep.mubr.bf16.mxu0 0
        %517 = vmatmul.mubr.bf16.gmra.mrb[0].mxu0 %v400
        %v518 = vpop.f32.mrb[0].mxu0
        %v519 = vadd.f32 0.0, %v518
        %v520 = vpop.f32.mrb[0].mxu0
        %v521 = vpop.f32.mrb[0].mxu0
        %v522 = vadd.f32 0.0, %v521
        %v523 = vpop.f32.mrb[0].mxu0
        %524 = vmatprep.mubr.bf16.mxu0 0
        %525 = vmatmul.mubr.bf16.gmra.mrb[0].mxu0 %v403
        %v526 = vpop.f32.mrb[0].mxu0
        %v527 = vadd.f32 0.0, %v526
        %v528 = vpop.f32.mrb[0].mxu0
        %v529 = vpop.f32.mrb[0].mxu0
        %v530 = vadd.f32 0.0, %v529
        %v531 = vpop.f32.mrb[0].mxu0
        %532 = vmatprep.mubr.bf16.mxu0 0
        %533 = vmatmul.mubr.bf16.gmra.mrb[0].mxu0 %v406
        %v534 = vpop.f32.mrb[0].mxu0
        %v535 = vadd.f32 0.0, %v534
        %v536 = vpop.f32.mrb[0].mxu0
        %v537 = vpop.f32.mrb[0].mxu0
        %v538 = vadd.f32 0.0, %v537
        %v539 = vpop.f32.mrb[0].mxu0
        %540 = vmatprep.mubr.bf16.mxu0 0
        %541 = vmatmul.mubr.bf16.gmra.mrb[0].mxu0 %v409
        %v542 = vpop.f32.mrb[0].mxu0
        %v543 = vadd.f32 0.0, %v542
        %v544 = vpop.f32.mrb[0].mxu0
        %v545 = vpop.f32.mrb[0].mxu0
        %v546 = vadd.f32 0.0, %v545
        %v547 = vpop.f32.mrb[0].mxu0
        %548 = vmatprep.mubr.bf16.mxu0 0
        %549 = vmatmul.mubr.bf16.gmra.mrb[0].mxu0 %v412
        %v550 = vpop.f32.mrb[0].mxu0
        %v551 = vadd.f32 0.0, %v550
        %v552 = vpop.f32.mrb[0].mxu0
        %v553 = vpop.f32.mrb[0].mxu0
        %v554 = vadd.f32 0.0, %v553
        %v555 = vpop.f32.mrb[0].mxu0
        %556 = vmatprep.mubr.bf16.mxu0 0
        %557 = vmatmul.mubr.bf16.gmra.mrb[0].mxu0 %v415
        %v558 = vpop.f32.mrb[0].mxu0
        %v559 = vadd.f32 0.0, %v558
        %v560 = vpop.f32.mrb[0].mxu0
        %v561 = vpop.f32.mrb[0].mxu0
        %v562 = vadd.f32 0.0, %v561
        %v563 = vpop.f32.mrb[0].mxu0
        %564 = vmatprep.mubr.bf16.mxu0 0
        %565 = vmatmul.mubr.bf16.gmra.mrb[0].mxu0 %v418
        %v566 = vpop.f32.mrb[0].mxu0
        %v567 = vadd.f32 0.0, %v566
        %v568 = vpop.f32.mrb[0].mxu0
        %v569 = vpop.f32.mrb[0].mxu0
        %v570 = vadd.f32 0.0, %v569
        %v571 = vpop.f32.mrb[0].mxu0
        %572 = vmatprep.mubr.bf16.mxu0 0
        %573 = vmatmul.mubr.bf16.gmra.mrb[0].mxu0 %v421
        %v574 = vpop.f32.mrb[0].mxu0
        %v575 = vadd.f32 0.0, %v574
        %v576 = vpop.f32.mrb[0].mxu0
        %v577 = vpop.f32.mrb[0].mxu0
        %v578 = vadd.f32 0.0, %v577
        %v579 = vpop.f32.mrb[0].mxu0
        %580 = vmatprep.mubr.bf16.mxu0 0
        %581 = vmatmul.mubr.bf16.gmra.mrb[0].mxu0 %v424
        %v582 = vpop.f32.mrb[0].mxu0
        %v583 = vadd.f32 0.0, %v582
        %v584 = vpop.f32.mrb[0].mxu0
        %v585 = vpop.f32.mrb[0].mxu0
        %v586 = vadd.f32 0.0, %v585
        %v587 = vpop.f32.mrb[0].mxu0
        %588 = vmatprep.mubr.bf16.mxu0 0
        %589 = vmatmul.mubr.bf16.gmra.mrb[0].mxu0 %v427
        %v590 = vpop.f32.mrb[0].mxu0
        %v591 = vadd.f32 0.0, %v590
        %v592 = vpop.f32.mrb[0].mxu0
        %v593 = vpop.f32.mrb[0].mxu0
        %v594 = vadd.f32 0.0, %v593
        %v595 = vpop.f32.mrb[0].mxu0
        %596 = vdwg.mxu0
        %vm597 = vcmask 523264
        %598 = vst.msk [vmem:[%s243] sm:$0xff] %vm597, %v471
        %599 = vst.msk [vmem:[%s243 + $0x8] sm:$0xff] %vm597, %v474
        %600 = vst.msk [vmem:[%s243 + $0x10] sm:$0xff] %vm597, %v479
        %601 = vst.msk [vmem:[%s243 + $0x18] sm:$0xff] %vm597, %v482
        %602 = vst.msk [vmem:[%s243 + $0x20] sm:$0xff] %vm597, %v487
        %603 = vst.msk [vmem:[%s243 + $0x28] sm:$0xff] %vm597, %v490
        %604 = vst.msk [vmem:[%s243 + $0x30] sm:$0xff] %vm597, %v495
        %605 = vst.msk [vmem:[%s243 + $0x38] sm:$0xff] %vm597, %v498
        %606 = vst.msk [vmem:[%s243 + $0x40] sm:$0xff] %vm597, %v503
        %607 = vst.msk [vmem:[%s243 + $0x48] sm:$0xff] %vm597, %v506
        %608 = vst.msk [vmem:[%s243 + $0x50] sm:$0xff] %vm597, %v511
        %609 = vst.msk [vmem:[%s243 + $0x58] sm:$0xff] %vm597, %v514
        %610 = vst.msk [vmem:[%s243 + $0x60] sm:$0xff] %vm597, %v519
        %611 = vst.msk [vmem:[%s243 + $0x68] sm:$0xff] %vm597, %v522
        %612 = vst.msk [vmem:[%s243 + $0x70] sm:$0xff] %vm597, %v527
        %613 = vst.msk [vmem:[%s243 + $0x78] sm:$0xff] %vm597, %v530
        %614 = vst.msk [vmem:[%s243 + $0x80] sm:$0xff] %vm597, %v535
        %615 = vst.msk [vmem:[%s243 + $0x88] sm:$0xff] %vm597, %v538
        %616 = vst.msk [vmem:[%s243 + $0x90] sm:$0xff] %vm597, %v543
        %617 = vst.msk [vmem:[%s243 + $0x98] sm:$0xff] %vm597, %v546
        %618 = vst.msk [vmem:[%s243 + $0xa0] sm:$0xff] %vm597, %v551
        %619 = vst.msk [vmem:[%s243 + $0xa8] sm:$0xff] %vm597, %v554
        %620 = vst.msk [vmem:[%s243 + $0xb0] sm:$0xff] %vm597, %v559
        %621 = vst.msk [vmem:[%s243 + $0xb8] sm:$0xff] %vm597, %v562
        %622 = vst.msk [vmem:[%s243 + $0xc0] sm:$0xff] %vm597, %v567
        %623 = vst.msk [vmem:[%s243 + $0xc8] sm:$0xff] %vm597, %v570
        %624 = vst.msk [vmem:[%s243 + $0xd0] sm:$0xff] %vm597, %v575
        %625 = vst.msk [vmem:[%s243 + $0xd8] sm:$0xff] %vm597, %v578
        %626 = vst.msk [vmem:[%s243 + $0xe0] sm:$0xff] %vm597, %v583
        %627 = vst.msk [vmem:[%s243 + $0xe8] sm:$0xff] %vm597, %v586
        %628 = vst.msk [vmem:[%s243 + $0xf0] sm:$0xff] %vm597, %v591
        %629 = vst.msk [vmem:[%s243 + $0xf8] sm:$0xff] %vm597, %v594
        %v630 = vld [vmem:[#allocation2] sm:$0x1]
        %v631 = vsel %vm597, %v471, 0.0
        %v632 = vsel %vm597, %v474, 0.0
        %v633 = vadd.f32 %v631, %v632
        %v634 = vsel %vm597, %v479, 0.0
        %v635 = vadd.f32 %v633, %v634
        %v636 = vsel %vm597, %v482, 0.0
        %v637 = vadd.f32 %v635, %v636
        %v638 = vsel %vm597, %v487, 0.0
        %v639 = vadd.f32 %v637, %v638
        %v640 = vsel %vm597, %v490, 0.0
        %v641 = vadd.f32 %v639, %v640
        %v642 = vsel %vm597, %v495, 0.0
        %v643 = vadd.f32 %v641, %v642
        %v644 = vsel %vm597, %v498, 0.0
        %v645 = vadd.f32 %v643, %v644
        %v646 = vsel %vm597, %v503, 0.0
        %v647 = vadd.f32 %v645, %v646
        %v648 = vsel %vm597, %v506, 0.0
        %v649 = vadd.f32 %v647, %v648
        %v650 = vsel %vm597, %v511, 0.0
        %v651 = vadd.f32 %v649, %v650
        %v652 = vsel %vm597, %v514, 0.0
        %v653 = vadd.f32 %v651, %v652
        %v654 = vsel %vm597, %v519, 0.0
        %v655 = vadd.f32 %v653, %v654
        %v656 = vsel %vm597, %v522, 0.0
        %v657 = vadd.f32 %v655, %v656
        %v658 = vsel %vm597, %v527, 0.0
        %v659 = vadd.f32 %v657, %v658
        %v660 = vsel %vm597, %v530, 0.0
        %v661 = vadd.f32 %v659, %v660
        %v662 = vsel %vm597, %v535, 0.0
        %v663 = vadd.f32 %v661, %v662
        %v664 = vsel %vm597, %v538, 0.0
        %v665 = vadd.f32 %v663, %v664
        %v666 = vsel %vm597, %v543, 0.0
        %v667 = vadd.f32 %v665, %v666
        %v668 = vsel %vm597, %v546, 0.0
        %v669 = vadd.f32 %v667, %v668
        %v670 = vsel %vm597, %v551, 0.0
        %v671 = vadd.f32 %v669, %v670
        %v672 = vsel %vm597, %v554, 0.0
        %v673 = vadd.f32 %v671, %v672
        %v674 = vsel %vm597, %v559, 0.0
        %v675 = vadd.f32 %v673, %v674
        %v676 = vsel %vm597, %v562, 0.0
        %v677 = vadd.f32 %v675, %v676
        %v678 = vsel %vm597, %v567, 0.0
        %v679 = vadd.f32 %v677, %v678
        %v680 = vsel %vm597, %v570, 0.0
        %v681 = vadd.f32 %v679, %v680
        %v682 = vsel %vm597, %v575, 0.0
        %v683 = vadd.f32 %v681, %v682
        %v684 = vsel %vm597, %v578, 0.0
        %v685 = vadd.f32 %v683, %v684
        %v686 = vsel %vm597, %v583, 0.0
        %v687 = vadd.f32 %v685, %v686
        %v688 = vsel %vm597, %v586, 0.0
        %v689 = vadd.f32 %v687, %v688
        %v690 = vsel %vm597, %v591, 0.0
        %v691 = vadd.f32 %v689, %v690
        %v692 = vsel %vm597, %v594, 0.0
        %v693 = vadd.f32 %v691, %v692
        %v694 = vrot.slane %v693, 4
        %v695 = vadd.f32 %v693, %v694
        %v696 = vrot.slane %v695, 2
        %v697 = vadd.f32 %v695, %v696
        %v698 = vrot.slane %v697, 1
        %v699 = vadd.f32 %v697, %v698
        %v700 = vadd.f32 %v630, %v699
        %vm701 = vcmask 516096
        %702 = vst.msk [vmem:[#allocation2] sm:$0x1] %vm701, %v700
        %v703 = vld [vmem:[#allocation4] sm:$0x1]
        %v704 = vmul.f32 %v471, %v471
        %v705 = vmul.f32 %v474, %v474
        %v706 = vmul.f32 %v479, %v479
        %v707 = vmul.f32 %v482, %v482
        %v708 = vmul.f32 %v487, %v487
        %v709 = vmul.f32 %v490, %v490
        %v710 = vmul.f32 %v495, %v495
        %v711 = vmul.f32 %v498, %v498
        %v712 = vmul.f32 %v503, %v503
        %v713 = vmul.f32 %v506, %v506
        %v714 = vmul.f32 %v511, %v511
        %v715 = vmul.f32 %v514, %v514
        %v716 = vmul.f32 %v519, %v519
        %v717 = vmul.f32 %v522, %v522
        %v718 = vmul.f32 %v527, %v527
        %v719 = vmul.f32 %v530, %v530
        %v720 = vmul.f32 %v535, %v535
        %v721 = vmul.f32 %v538, %v538
        %v722 = vmul.f32 %v543, %v543
        %v723 = vmul.f32 %v546, %v546
        %v724 = vmul.f32 %v551, %v551
        %v725 = vmul.f32 %v554, %v554
        %v726 = vmul.f32 %v559, %v559
        %v727 = vmul.f32 %v562, %v562
        %v728 = vmul.f32 %v567, %v567
        %v729 = vmul.f32 %v570, %v570
        %v730 = vmul.f32 %v575, %v575
        %v731 = vmul.f32 %v578, %v578
        %v732 = vmul.f32 %v583, %v583
        %v733 = vmul.f32 %v586, %v586
        %v734 = vmul.f32 %v591, %v591
        %v735 = vmul.f32 %v594, %v594
        %v736 = vsel %vm597, %v704, 0.0
        %v737 = vsel %vm597, %v705, 0.0
        %v738 = vadd.f32 %v736, %v737
        %v739 = vsel %vm597, %v706, 0.0
        %v740 = vadd.f32 %v738, %v739
        %v741 = vsel %vm597, %v707, 0.0
        %v742 = vadd.f32 %v740, %v741
        %v743 = vsel %vm597, %v708, 0.0
        %v744 = vadd.f32 %v742, %v743
        %v745 = vsel %vm597, %v709, 0.0
        %v746 = vadd.f32 %v744, %v745
        %v747 = vsel %vm597, %v710, 0.0
        %v748 = vadd.f32 %v746, %v747
        %v749 = vsel %vm597, %v711, 0.0
        %v750 = vadd.f32 %v748, %v749
        %v751 = vsel %vm597, %v712, 0.0
        %v752 = vadd.f32 %v750, %v751
        %v753 = vsel %vm597, %v713, 0.0
        %v754 = vadd.f32 %v752, %v753
        %v755 = vsel %vm597, %v714, 0.0
        %v756 = vadd.f32 %v754, %v755
        %v757 = vsel %vm597, %v715, 0.0
        %v758 = vadd.f32 %v756, %v757
        %v759 = vsel %vm597, %v716, 0.0
        %v760 = vadd.f32 %v758, %v759
        %v761 = vsel %vm597, %v717, 0.0
        %v762 = vadd.f32 %v760, %v761
        %v763 = vsel %vm597, %v718, 0.0
        %v764 = vadd.f32 %v762, %v763
        %v765 = vsel %vm597, %v719, 0.0
        %v766 = vadd.f32 %v764, %v765
        %v767 = vsel %vm597, %v720, 0.0
        %v768 = vadd.f32 %v766, %v767
        %v769 = vsel %vm597, %v721, 0.0
        %v770 = vadd.f32 %v768, %v769
        %v771 = vsel %vm597, %v722, 0.0
        %v772 = vadd.f32 %v770, %v771
        %v773 = vsel %vm597, %v723, 0.0
        %v774 = vadd.f32 %v772, %v773
        %v775 = vsel %vm597, %v724, 0.0
        %v776 = vadd.f32 %v774, %v775
        %v777 = vsel %vm597, %v725, 0.0
        %v778 = vadd.f32 %v776, %v777
        %v779 = vsel %vm597, %v726, 0.0
        %v780 = vadd.f32 %v778, %v779
        %v781 = vsel %vm597, %v727, 0.0
        %v782 = vadd.f32 %v780, %v781
        %v783 = vsel %vm597, %v728, 0.0
        %v784 = vadd.f32 %v782, %v783
        %v785 = vsel %vm597, %v729, 0.0
        %v786 = vadd.f32 %v784, %v785
        %v787 = vsel %vm597, %v730, 0.0
        %v788 = vadd.f32 %v786, %v787
        %v789 = vsel %vm597, %v731, 0.0
        %v790 = vadd.f32 %v788, %v789
        %v791 = vsel %vm597, %v732, 0.0
        %v792 = vadd.f32 %v790, %v791
        %v793 = vsel %vm597, %v733, 0.0
        %v794 = vadd.f32 %v792, %v793
        %v795 = vsel %vm597, %v734, 0.0
        %v796 = vadd.f32 %v794, %v795
        %v797 = vsel %vm597, %v735, 0.0
        %v798 = vadd.f32 %v796, %v797
        %v799 = vrot.slane %v798, 4
        %v800 = vadd.f32 %v798, %v799
        %v801 = vrot.slane %v800, 2
        %v802 = vadd.f32 %v800, %v801
        %v803 = vrot.slane %v802, 1
        %v804 = vadd.f32 %v802, %v803
        %v805 = vadd.f32 %v703, %v804
        %806 = vst.msk [vmem:[#allocation4] sm:$0x1] %vm701, %v805
        %s807 = smul.u32 32, %s23
        %p808 = scmp.lt.s32.totalorder %s807, 1023
        %s809 = scalar_select %p808, %s807, 1023
        %p810 = scmp.lt.s32.totalorder %s22, 0
        %s811 = scalar_select %p810, %s22, 0
        %s812 = sadd.s32 %s811, %s809
        %s813 = smul.addr %s812, 8
        %s814 = scalar_lea.vmem %s2, %s813
        // Predicated region
        $region33: #{tpu_custom_call.1} parent=27 // pred_check
          %p815 = pneg %p102
        $region34: #{tpu_custom_call.1} parent=27 // pred_check_branch
          %817 = sbr.rel (%p815) target = $region36
        $region35: #{tpu_custom_call.1} parent=27 // pred_region
          %s818 = smul.u32 32, %s23
        $region36: #{tpu_custom_call.1} parent=27 // pred_fallthru
          _
        // Predicated region
        $region37: #{tpu_custom_call.1} parent=27 // pred_check
          %p819 = pneg %p128
        $region38: #{tpu_custom_call.1} parent=27 // pred_check_branch
          %821 = sbr.rel (%p819) target = $region40
        $region39: #{tpu_custom_call.1} parent=27 // pred_region
          %s823 = ssub.s32 16, 16
          %824 = vsyncadd [#allocation3], %s823
          %s825 = smul.addr %s22, 16
          %s826 = scalar_lea.hbm %s3, %s825
          %s828 = sshll.u32 [#allocation2], 4
          %s829 = int_to_ptr.vmem [resolvable:$true] %s828
          %831 = dma.vmem_to_hbm [thread:$0]  %s829, 16, %s826, [#allocation3]
        $region40: #{tpu_custom_call.1} parent=27 // pred_fallthru
          _
        // Predicated region
        $region41: #{tpu_custom_call.1} parent=27 // pred_check
          %p832 = pneg %p154
        $region42: #{tpu_custom_call.1} parent=27 // pred_check_branch
          %834 = sbr.rel (%p832) target = $region44
        $region43: #{tpu_custom_call.1} parent=27 // pred_region
          %s836 = ssub.s32 16, 16
          %837 = vsyncadd [#allocation5], %s836
          %s838 = smul.addr %s22, 16
          %s839 = scalar_lea.hbm %s4, %s838
          %s841 = sshll.u32 [#allocation4], 4
          %s842 = int_to_ptr.vmem [resolvable:$true] %s841
          %844 = dma.vmem_to_hbm [thread:$0]  %s842, 16, %s839, [#allocation5]
        $region44: #{tpu_custom_call.1} parent=27 // pred_fallthru
          _
        // Predicated region
        $region45: #{tpu_custom_call.1} parent=27 // pred_check
          %p845 = pneg %p128
        $region46: #{tpu_custom_call.1} parent=27 // pred_check_branch
          %847 = sbr.rel (%p845) target = $region48
        $region47: #{tpu_custom_call.1} parent=27 // pred_region
          %848 = dma.done [#allocation3], 16
        $region48: #{tpu_custom_call.1} parent=27 // pred_fallthru
          _
        // Predicated region
        $region49: #{tpu_custom_call.1} parent=27 // pred_check
          %p849 = pneg %p154
        $region50: #{tpu_custom_call.1} parent=27 // pred_check_branch
          %851 = sbr.rel (%p849) target = $region52
        $region51: #{tpu_custom_call.1} parent=27 // pred_region
          %852 = dma.done [#allocation5], 16
        $region52: #{tpu_custom_call.1} parent=27 // pred_fallthru
          _
      $region28: #{tpu_custom_call.1} parent=5 // pred_fallthru
        _
      %p853 = scmp.le.s32.totalorder 2, %s13
      // Predicated region
      $region53: #{tpu_custom_call.1} parent=5 // pred_check
        %p854 = pneg %p853
      $region54: #{tpu_custom_call.1} parent=5 // pred_check_branch
        %856 = sbr.rel (%p854) target = $region56
      $region55: #{tpu_custom_call.1} parent=5 // pred_region
        %s857 = ssub.s32 %s13, 2
        // Predicated region
        $region57: #{tpu_custom_call.1} parent=55 // pred_check
          %p858 = pneg %p108
        $region58: #{tpu_custom_call.1} parent=55 // pred_check_branch
          %860 = sbr.rel (%p858) target = $region60
        $region59: #{tpu_custom_call.1} parent=55 // pred_region
          %s861 = smul.u32 32, %s25
          %p862 = scmp.lt.s32.totalorder %s861, 1023
          %s863 = scalar_select %p862, %s861, 1023
          %p864 = scmp.lt.s32.totalorder %s24, 0
          %s865 = scalar_select %p864, %s24, 0
          %s866 = sadd.s32 %s865, %s863
          %s867 = smul.addr %s866, 8
          %s868 = scalar_lea.vmem %s2, %s867
        $region60: #{tpu_custom_call.1} parent=55 // pred_fallthru
          _
      $region56: #{tpu_custom_call.1} parent=5 // pred_fallthru
        _
    $region6: #{tpu_custom_call.1} parent=1 // loop_footer
      %s17 = sadd.s32 1, %s13
    $region7: #{tpu_custom_call.1} parent=1 // loop_footer_branch
      %12 = sbr.rel target = $region3
    $region8: #{tpu_custom_call.1} parent=1 // loop_exit
      _
    %869 = vsyncpa [#allocation3], 1
    %s870 = scalar_lea.sflag [#allocation3], 1
    %871 = vsyncpa %s870, 1
    %872 = vsyncpa [#allocation5], 1

</llo_original>
